<compile_context>
chip_gen: v7x
topology: tpu7x:2x2x1
jax: 0.10.0
libtpu: 0.0.40
codegen_flags: <defaults>
</compile_context>

<pallas_src>
import functools

import jax
import jax.numpy as jnp
from jax.experimental import pallas as pl
from jax.experimental.pallas import tpu as pltpu


def _round_up(x, m):
    return (x + m - 1) // m * m


def _actor_kernel(threshold, max_action,
                  sa_ref, act_ref,
                  w1_ref, b1_ref, w2_ref, b2_ref, w3_ref, b3_ref,
                  out_ref):
    # l1: (state||action) @ W1 + b1, relu.  bf16 MXU inputs, f32 accumulation.
    sa = sa_ref[...].astype(jnp.bfloat16)
    h1 = jnp.dot(sa, w1_ref[...], preferred_element_type=jnp.float32) + b1_ref[...]
    h1 = jnp.maximum(h1, 0.0)

    # l2 + relu
    h2 = (jnp.dot(h1.astype(jnp.bfloat16), w2_ref[...],
                  preferred_element_type=jnp.float32) + b2_ref[...])
    h2 = jnp.maximum(h2, 0.0)

    # l3 -> scaled tanh perturbation
    a = (jnp.dot(h2.astype(jnp.bfloat16), w3_ref[...],
                 preferred_element_type=jnp.float32) + b3_ref[...])
    a = threshold * max_action * jnp.tanh(a)

    # residual add + clamp
    out = jnp.clip(a + act_ref[...], -max_action, max_action)
    out_ref[...] = out.astype(out_ref.dtype)


def actor_forward(state, action, params, max_action, threshold=0.05, tile_b=256):
    """Pallas implementation of Actor.forward(state, action)."""
    w1, b1, w2, b2, w3, b3 = params
    B = state.shape[0]
    action_dim = action.shape[1]
    in_dim, h1_dim = w1.shape
    h2_dim = w2.shape[1]

    # Concat in the wrapper so layer 1 is a single MXU dot inside the kernel.
    sa = jnp.concatenate([state, action], axis=1).astype(jnp.float32)
    action_f = action.astype(jnp.float32)

    # Pad the batch so it tiles cleanly (sublane multiple of 8), cap tile at 256.
    pb = _round_up(max(B, 8), 8)
    tb = min(tile_b, pb)
    pb = _round_up(pb, tb)
    if pb != B:
        sa = jnp.pad(sa, ((0, pb - B), (0, 0)))
        action_f = jnp.pad(action_f, ((0, pb - B), (0, 0)))

    grid = (pb // tb,)

    def batched(feat):
        return pl.BlockSpec((tb, feat), lambda i: (i, 0))

    def resident(shape):
        # Constant index_map -> block is VMEM-resident across all grid steps.
        return pl.BlockSpec(shape, lambda i: (0, 0))

    kernel = functools.partial(_actor_kernel, float(threshold), float(max_action))

    out = pl.pallas_call(
        kernel,
        out_shape=jax.ShapeDtypeStruct((pb, action_dim), jnp.float32),
        grid=grid,
        in_specs=[
            batched(in_dim),                     # state||action tile
            batched(action_dim),                 # action tile (residual path)
            resident((in_dim, h1_dim)),          # W1 (bf16)
            resident((1, h1_dim)),               # b1 (f32)
            resident((h1_dim, h2_dim)),          # W2 (bf16)
            resident((1, h2_dim)),               # b2 (f32)
            resident((h2_dim, action_dim)),      # W3 (bf16)
            resident((1, action_dim)),           # b3 (f32)
        ],
        out_specs=batched(action_dim),
        compiler_params=pltpu.CompilerParams(
            dimension_semantics=("parallel",)),  # megacore on v7x
    )(sa, action_f, w1, b1, w2, b2, w3, b3)

    return out[:B]


def init_actor_params(key, state_dim, action_dim, h1=400, h2=300):
    """PyTorch-style uniform(+-1/sqrt(fan_in)) init; weights stored in bf16."""
    def linear(key, fan_in, fan_out):
        kw, kb = jax.random.split(key)
        bound = 1.0 / jnp.sqrt(fan_in)
        w = jax.random.uniform(kw, (fan_in, fan_out), jnp.float32, -bound, bound)
        b = jax.random.uniform(kb, (1, fan_out), jnp.float32, -bound, bound)
        return w.astype(jnp.bfloat16), b   # bf16 weights, f32 biases

    k1, k2, k3 = jax.random.split(key, 3)
    w1, b1 = linear(k1, state_dim + action_dim, h1)   # (sd+ad, 400)
    w2, b2 = linear(k2, h1, h2)                       # (400, 300)
    w3, b3 = linear(k3, h2, action_dim)               # (300, ad)
    return (w1, b1, w2, b2, w3, b3)


def actor_reference(state, action, params, max_action, threshold=0.05):
    """Pure-JAX reference mirroring the kernel's bf16-in / f32-accumulate math."""
    w1, b1, w2, b2, w3, b3 = params
    sa = jnp.concatenate([state, action], axis=1)

    def mm(x, w):
        return jnp.dot(x.astype(jnp.bfloat16), w, preferred_element_type=jnp.float32)

    h1 = jax.nn.relu(mm(sa, w1) + b1)
    h2 = jax.nn.relu(mm(h1, w2) + b2)
    a = threshold * max_action * jnp.tanh(mm(h2, w3) + b3)
    return jnp.clip(a + action, -max_action, max_action)


if __name__ == "__main__":
    key = jax.random.PRNGKey(0)
    B, state_dim, action_dim = 8, 17, 6
    max_action = 1.0
    threshold = 0.05

    k_s, k_a, k_p = jax.random.split(key, 3)
    state = jax.random.normal(k_s, (B, state_dim), jnp.float32)
    action = jnp.tanh(jax.random.normal(k_a, (B, action_dim), jnp.float32))
    params = init_actor_params(k_p, state_dim, action_dim)

    out = actor_forward(state, action, params, max_action, threshold)
    out = jax.block_until_ready(out)

    ref = actor_reference(state, action, params, max_action, threshold)
    assert out.shape == (B, action_dim)
    assert jnp.allclose(out, ref, atol=2e-4, rtol=2e-4), "mismatch vs reference"
    print("KERNEL_OK")
</pallas_src>

<mosaic_0001>
module attributes {stable_mosaic.version = 11 : i64} {
  func.func @_actor_kernel(%arg0: i32, %arg1: memref<8x23xf32, #tpu.memory_space<vmem>>, %arg2: memref<8x6xf32, #tpu.memory_space<vmem>>, %arg3: memref<23x400xbf16, #tpu.memory_space<vmem>>, %arg4: memref<1x400xf32, #tpu.memory_space<vmem>>, %arg5: memref<400x300xbf16, #tpu.memory_space<vmem>>, %arg6: memref<1x300xf32, #tpu.memory_space<vmem>>, %arg7: memref<300x6xbf16, #tpu.memory_space<vmem>>, %arg8: memref<1x6xf32, #tpu.memory_space<vmem>>, %arg9: memref<8x6xf32, #tpu.memory_space<vmem>>) attributes {dimension_semantics = [#tpu.dimension_semantics<parallel>], iteration_bounds = array<i64: 1>, scalar_prefetch = 0 : i64, scratch_operands = 0 : i64, tpu.core_type = #tpu.core_type<tc>, window_params = [{transform_indices = @transform_0, window_bounds = array<i64: 8, 23>}, {transform_indices = @transform_1, window_bounds = array<i64: 8, 6>}, {pipeline_mode = #tpu.pipeline_mode<synchronous>, transform_indices = @transform_2, window_bounds = array<i64: 23, 400>}, {pipeline_mode = #tpu.pipeline_mode<synchronous>, transform_indices = @transform_3, window_bounds = array<i64: 1, 400>}, {pipeline_mode = #tpu.pipeline_mode<synchronous>, transform_indices = @transform_4, window_bounds = array<i64: 400, 300>}, {pipeline_mode = #tpu.pipeline_mode<synchronous>, transform_indices = @transform_5, window_bounds = array<i64: 1, 300>}, {pipeline_mode = #tpu.pipeline_mode<synchronous>, transform_indices = @transform_6, window_bounds = array<i64: 300, 6>}, {pipeline_mode = #tpu.pipeline_mode<synchronous>, transform_indices = @transform_7, window_bounds = array<i64: 1, 6>}, {transform_indices = @transform_8, window_bounds = array<i64: 8, 6>}]} {
    %c0 = arith.constant 0 : index
    %c0_0 = arith.constant 0 : index
    %0 = vector.load %arg1[%c0, %c0_0] : memref<8x23xf32, #tpu.memory_space<vmem>>, vector<8x23xf32>
    %1 = arith.truncf %0 : vector<8x23xf32> to vector<8x23xbf16>
    %c0_1 = arith.constant 0 : index
    %c0_2 = arith.constant 0 : index
    %2 = vector.load %arg3[%c0_1, %c0_2] : memref<23x400xbf16, #tpu.memory_space<vmem>>, vector<23x400xbf16>
    %cst = arith.constant dense<0.000000e+00> : vector<8x400xf32>
    %3 = tpu.matmul %1, %2, %cst {dimension_numbers = #tpu.dot_dimension_numbers<[1], [0], [0], [1], [0, 0, 1, 1], [], []>} : vector<8x23xbf16>, vector<23x400xbf16>, vector<8x400xf32> -> vector<8x400xf32>
    %c0_3 = arith.constant 0 : index
    %c0_4 = arith.constant 0 : index
    %4 = vector.load %arg4[%c0_3, %c0_4] : memref<1x400xf32, #tpu.memory_space<vmem>>, vector<1x400xf32>
    %5 = vector.broadcast %4 : vector<1x400xf32> to vector<8x400xf32>
    %6 = arith.addf %3, %5 : vector<8x400xf32>
    %cst_5 = arith.constant 0.000000e+00 : f32
    %7 = vector.broadcast %cst_5 : f32 to vector<8x400xf32>
    %8 = arith.maximumf %6, %7 : vector<8x400xf32>
    %9 = arith.truncf %8 : vector<8x400xf32> to vector<8x400xbf16>
    %c0_6 = arith.constant 0 : index
    %c0_7 = arith.constant 0 : index
    %10 = vector.load %arg5[%c0_6, %c0_7] : memref<400x300xbf16, #tpu.memory_space<vmem>>, vector<400x300xbf16>
    %cst_8 = arith.constant dense<0.000000e+00> : vector<8x300xf32>
    %11 = tpu.matmul %9, %10, %cst_8 {dimension_numbers = #tpu.dot_dimension_numbers<[1], [0], [0], [1], [0, 0, 1, 1], [], []>} : vector<8x400xbf16>, vector<400x300xbf16>, vector<8x300xf32> -> vector<8x300xf32>
    %c0_9 = arith.constant 0 : index
    %c0_10 = arith.constant 0 : index
    %12 = vector.load %arg6[%c0_9, %c0_10] : memref<1x300xf32, #tpu.memory_space<vmem>>, vector<1x300xf32>
    %13 = vector.broadcast %12 : vector<1x300xf32> to vector<8x300xf32>
    %14 = arith.addf %11, %13 : vector<8x300xf32>
    %cst_11 = arith.constant 0.000000e+00 : f32
    %15 = vector.broadcast %cst_11 : f32 to vector<8x300xf32>
    %16 = arith.maximumf %14, %15 : vector<8x300xf32>
    %17 = arith.truncf %16 : vector<8x300xf32> to vector<8x300xbf16>
    %c0_12 = arith.constant 0 : index
    %c0_13 = arith.constant 0 : index
    %18 = vector.load %arg7[%c0_12, %c0_13] : memref<300x6xbf16, #tpu.memory_space<vmem>>, vector<300x6xbf16>
    %cst_14 = arith.constant dense<0.000000e+00> : vector<8x6xf32>
    %19 = tpu.matmul %17, %18, %cst_14 {dimension_numbers = #tpu.dot_dimension_numbers<[1], [0], [0], [1], [0, 0, 1, 1], [], []>} : vector<8x300xbf16>, vector<300x6xbf16>, vector<8x6xf32> -> vector<8x6xf32>
    %c0_15 = arith.constant 0 : index
    %c0_16 = arith.constant 0 : index
    %20 = vector.load %arg8[%c0_15, %c0_16] : memref<1x6xf32, #tpu.memory_space<vmem>>, vector<1x6xf32>
    %21 = vector.broadcast %20 : vector<1x6xf32> to vector<8x6xf32>
    %22 = arith.addf %19, %21 : vector<8x6xf32>
    %23 = math.tanh %22 : vector<8x6xf32>
    %cst_17 = arith.constant 5.000000e-02 : f32
    %24 = vector.broadcast %cst_17 : f32 to vector<8x6xf32>
    %25 = arith.mulf %24, %23 : vector<8x6xf32>
    %c0_18 = arith.constant 0 : index
    %c0_19 = arith.constant 0 : index
    %26 = vector.load %arg2[%c0_18, %c0_19] : memref<8x6xf32, #tpu.memory_space<vmem>>, vector<8x6xf32>
    %27 = arith.addf %25, %26 : vector<8x6xf32>
    %cst_20 = arith.constant -1.000000e+00 : f32
    %cst_21 = arith.constant 1.000000e+00 : f32
    %28 = vector.broadcast %cst_20 : f32 to vector<8x6xf32>
    %29 = arith.maximumf %28, %27 : vector<8x6xf32>
    %30 = vector.broadcast %cst_21 : f32 to vector<8x6xf32>
    %31 = arith.minimumf %30, %29 : vector<8x6xf32>
    %c0_22 = arith.constant 0 : index
    %c0_23 = arith.constant 0 : index
    %32 = vector.load %arg9[%c0_22, %c0_23] : memref<8x6xf32, #tpu.memory_space<vmem>>, vector<8x6xf32>
    tpu.vector_store %arg9[%c0_22, %c0_23], %31 {strides = array<i32>} : memref<8x6xf32, #tpu.memory_space<vmem>>, vector<8x6xf32>,
    return
  }
  func.func @transform_0(%arg0: i32) -> (i32, i32) {
    %c0_i32 = arith.constant 0 : i32
    %c0_i32_0 = arith.constant 0 : i32
    return %arg0, %c0_i32 : i32, i32
  }
  func.func @transform_1(%arg0: i32) -> (i32, i32) {
    %c0_i32 = arith.constant 0 : i32
    %c0_i32_0 = arith.constant 0 : i32
    return %arg0, %c0_i32 : i32, i32
  }
  func.func @transform_2(%arg0: i32) -> (i32, i32) {
    %c0_i32 = arith.constant 0 : i32
    %c0_i32_0 = arith.constant 0 : i32
    %c0_i32_1 = arith.constant 0 : i32
    return %c0_i32, %c0_i32_0 : i32, i32
  }
  func.func @transform_3(%arg0: i32) -> (i32, i32) {
    %c0_i32 = arith.constant 0 : i32
    %c0_i32_0 = arith.constant 0 : i32
    %c0_i32_1 = arith.constant 0 : i32
    return %c0_i32, %c0_i32_0 : i32, i32
  }
  func.func @transform_4(%arg0: i32) -> (i32, i32) {
    %c0_i32 = arith.constant 0 : i32
    %c0_i32_0 = arith.constant 0 : i32
    %c0_i32_1 = arith.constant 0 : i32
    return %c0_i32, %c0_i32_0 : i32, i32
  }
  func.func @transform_5(%arg0: i32) -> (i32, i32) {
    %c0_i32 = arith.constant 0 : i32
    %c0_i32_0 = arith.constant 0 : i32
    %c0_i32_1 = arith.constant 0 : i32
    return %c0_i32, %c0_i32_0 : i32, i32
  }
  func.func @transform_6(%arg0: i32) -> (i32, i32) {
    %c0_i32 = arith.constant 0 : i32
    %c0_i32_0 = arith.constant 0 : i32
    %c0_i32_1 = arith.constant 0 : i32
    return %c0_i32, %c0_i32_0 : i32, i32
  }
  func.func @transform_7(%arg0: i32) -> (i32, i32) {
    %c0_i32 = arith.constant 0 : i32
    %c0_i32_0 = arith.constant 0 : i32
    %c0_i32_1 = arith.constant 0 : i32
    return %c0_i32, %c0_i32_0 : i32, i32
  }
  func.func @transform_8(%arg0: i32) -> (i32, i32) {
    %c0_i32 = arith.constant 0 : i32
    %c0_i32_0 = arith.constant 0 : i32
    return %arg0, %c0_i32 : i32, i32
  }
}

</mosaic_0001>

<llo_original>
// kernel: tpu_custom_call.1
$region0: #{tpu_custom_call.1}
  #allocation0 [shape = 'u32[]', space=smem, size = 0x4, offset = 0x4, fixed_abs, tag = 'smem constant byte address 0x4 - core index']
  #allocation1 [shape = 'u32[144,128]{1,0:T(1,128)}', space=vmem, size = 0x12000, scoped, tag = 'internal scratch']
  %s0 = inlined_call_operand.vmem [shape: f32[8,23], index: 0, kind: input, shape index: {}]
  %s1 = inlined_call_operand.vmem [shape: f32[8,6], index: 1, kind: input, shape index: {}]
  %s2 = inlined_call_operand.vmem [shape: bf16[23,400], index: 2, kind: input, shape index: {}]
  %s3 = inlined_call_operand.vmem [shape: f32[1,400], index: 3, kind: input, shape index: {}]
  %s4 = inlined_call_operand.hbm [shape: bf16[400,300], index: 4, kind: input, shape index: {}]
  %s5 = inlined_call_operand.vmem [shape: f32[1,300], index: 5, kind: input, shape index: {}]
  %s6 = inlined_call_operand.vmem [shape: bf16[300,6], index: 6, kind: input, shape index: {}]
  %s7 = inlined_call_operand.vmem [shape: f32[1,6], index: 7, kind: input, shape index: {}]
  %s8 = inlined_call_operand.hbm [shape: f32[8,6], index: 8, kind: output, shape index: {}]
  %s9 = sld [smem:[#allocation0]]
  $region46: #{tpu_custom_call.1} parent=0
    _
  %s11 = ssub.s32 1, %s9
  %s12 = scalar_select 0, %s11, %s9
  $region1: #{tpu_custom_call.1} parent=0
    #allocation2 [shape = 'u8[307200]{0}', space=vmem, size = 0x4b000, scoped, tag = 'input window, operand 4, single buffered']
    #allocation3 [shape = 's32[1]{0}', space=sflag, size = 0x4, scoped, tag = 'scoped memory for tpu_custom_call.1']
    #allocation4 [shape = 's32[1]{0}', space=sflag, size = 0x4, scoped, tag = 'scoped memory for tpu_custom_call.1']
    #allocation5 [shape = 'u8[4096]{0}', space=vmem, size = 0x1000, scoped, tag = 'output window, operand 0, single buffered']
    %13 = vsyncpa [#allocation3], 0
    %14 = vsyncpa [#allocation4], 0
    // Predicated region
    $region2: #{tpu_custom_call.1} parent=1 // pred_check
      _
    $region3: #{tpu_custom_call.1} parent=1 // pred_check_branch
      %16 = sbr.rel (0) target = $region5
    $region4: #{tpu_custom_call.1} parent=1 // pred_region
      _
    $region5: #{tpu_custom_call.1} parent=1 // pred_fallthru
      _
    // Predicated region
    $region6: #{tpu_custom_call.1} parent=1 // pred_check
      _
    $region7: #{tpu_custom_call.1} parent=1 // pred_check_branch
      %18 = sbr.rel (0) target = $region9
    $region8: #{tpu_custom_call.1} parent=1 // pred_region
      _
    $region9: #{tpu_custom_call.1} parent=1 // pred_fallthru
      _
    // Predicated region
    $region10: #{tpu_custom_call.1} parent=1 // pred_check
      _
    $region11: #{tpu_custom_call.1} parent=1 // pred_check_branch
      %20 = sbr.rel (0) target = $region13
    $region12: #{tpu_custom_call.1} parent=1 // pred_region
      _
    $region13: #{tpu_custom_call.1} parent=1 // pred_fallthru
      _
    // Predicated region
    $region14: #{tpu_custom_call.1} parent=1 // pred_check
      _
    $region15: #{tpu_custom_call.1} parent=1 // pred_check_branch
      %22 = sbr.rel (0) target = $region17
    $region16: #{tpu_custom_call.1} parent=1 // pred_region
      _
    $region17: #{tpu_custom_call.1} parent=1 // pred_fallthru
      _
    // Predicated region
    $region18: #{tpu_custom_call.1} parent=1 // pred_check
      _
    $region19: #{tpu_custom_call.1} parent=1 // pred_check_branch
      %24 = sbr.rel (0) target = $region21
    $region20: #{tpu_custom_call.1} parent=1 // pred_region
      %s26 = ssub.s32 9600, 9600
      %27 = vsyncadd [#allocation3], %s26
      %s28 = sshll.u32 [#allocation2], 4
      %s29 = int_to_ptr.vmem [resolvable:$true] %s28
      %34 = dma.hbm_to_vmem [thread:$0]  %s4, 9600, %s29, [#allocation3], 192, 192, 12
    $region21: #{tpu_custom_call.1} parent=1 // pred_fallthru
      _
    // Predicated region
    $region22: #{tpu_custom_call.1} parent=1 // pred_check
      _
    $region23: #{tpu_custom_call.1} parent=1 // pred_check_branch
      %36 = sbr.rel (0) target = $region25
    $region24: #{tpu_custom_call.1} parent=1 // pred_region
      _
    $region25: #{tpu_custom_call.1} parent=1 // pred_fallthru
      _
    // Predicated region
    $region26: #{tpu_custom_call.1} parent=1 // pred_check
      _
    $region27: #{tpu_custom_call.1} parent=1 // pred_check_branch
      %38 = sbr.rel (0) target = $region29
    $region28: #{tpu_custom_call.1} parent=1 // pred_region
      _
    $region29: #{tpu_custom_call.1} parent=1 // pred_fallthru
      _
    // Predicated region
    $region30: #{tpu_custom_call.1} parent=1 // pred_check
      _
    $region31: #{tpu_custom_call.1} parent=1 // pred_check_branch
      %40 = sbr.rel (0) target = $region33
    $region32: #{tpu_custom_call.1} parent=1 // pred_region
      _
    $region33: #{tpu_custom_call.1} parent=1 // pred_fallthru
      _
    // Predicated region
    $region34: #{tpu_custom_call.1} parent=1 // pred_check
      _
    $region35: #{tpu_custom_call.1} parent=1 // pred_check_branch
      %42 = sbr.rel (0) target = $region37
    $region36: #{tpu_custom_call.1} parent=1 // pred_region
      %43 = dma.done [#allocation3], 9600
    $region37: #{tpu_custom_call.1} parent=1 // pred_fallthru
      _
    %v45 = vld [vmem:[%s0] sm:$0xff]
    %v46 = vpack.c.bf16 %v45, %v45
    %v47 = vld [vmem:[%s2] sm:$0xff]
    %v48 = vld [vmem:[%s2 + $0x8] sm:$0xff]
    %v49 = vld [vmem:[%s2 + $0x10] sm:$0xff]
    %v50 = vld [vmem:[%s2 + $0x18] sm:$0xff]
    %v51 = vld [vmem:[%s2 + $0x20] sm:$0xff]
    %v52 = vld [vmem:[%s2 + $0x28] sm:$0xff]
    %v53 = vld [vmem:[%s3] sm:$0xf]
    %v55 = vlaneseq
    %v56 = vshrl.u32 %v55, 7
    %v57 = vsub.s32 0, %v56
    %v58 = vrot.slane %v53, %v57
    %v59 = vlaneseq
    %v60 = vshrl.u32 %v59, 7
    %v61 = vsub.s32 1, %v60
    %v62 = vrot.slane %v53, %v61
    %v63 = vlaneseq
    %v64 = vshrl.u32 %v63, 7
    %v65 = vsub.s32 2, %v64
    %v66 = vrot.slane %v53, %v65
    %v67 = vlaneseq
    %v68 = vshrl.u32 %v67, 7
    %v69 = vsub.s32 3, %v68
    %v70 = vrot.slane %v53, %v69
    %v81 = vunpack.c.l.b16 %v47
    %v82 = vunpack.c.h.b16 %v47
    %v83 = vunpack.c.l.b16 %v48
    %v84 = vunpack.c.h.b16 %v48
    %v85 = vunpack.c.l.b16 %v49
    %v86 = vunpack.c.h.b16 %v49
    %v87 = vunpack.c.l.b16 %v50
    %v88 = vunpack.c.h.b16 %v50
    %v89 = vunpack.c.l.b16 %v51
    %v90 = vunpack.c.h.b16 %v51
    %v91 = vunpack.c.l.b16 %v52
    %v92 = vunpack.c.h.b16 %v52
    %v93 = vpack.c.b16 %v85, %v81
    %v94 = vpack.c.b16 %v86, %v82
    %v95 = vpack.c.b16 %v87, %v83
    %v96 = vpack.c.b16 %v88, %v84
    %v97 = vpack.c.b16 %v89, %v89
    %v98 = vpack.c.b16 %v90, %v90
    %v99 = vpack.c.b16 %v91, %v91
    %v100 = vpack.c.b16 %v92, %v92
    %vm105 = vcmask 187392
    %v107 = vsel %vm105, %v46, 0
    %vm109 = vcmask 1042432
    %vm110 = vcmask 1043456
    %v111 = vsel %vm109, 4294967295, 65535
    %v112 = vsel %vm110, %v111, 0
    %v114 = vand.u32 %v97, %v112
    %v117 = vand.u32 %v98, %v112
    %v120 = vand.u32 %v99, %v112
    %v123 = vand.u32 %v100, %v112
    %125 = vmatprep.subr.bf16.mxu0 %v94
    %126 = vmatpush1.bf16.msra.mxu0 %v93
    %127 = vmatprep.subr.bf16.mxu0 %v117
    %128 = vmatpush1.bf16.msra.mxu0 %v114
    %129 = vmatprep.subr.bf16.mxu0 0
    %130 = vmatpush1.bf16.msra.mxu0 0
    %131 = vmatprep.subr.bf16.mxu0 0
    %132 = vmatpush1.bf16.msra.mxu0 0
    %133 = vmatprep.subr.bf16.mxu0 0
    %134 = vmatpush1.bf16.msra.mxu0 0
    %135 = vmatprep.subr.bf16.mxu0 0
    %136 = vmatpush1.bf16.msra.mxu0 0
    %137 = vmatprep.subr.bf16.mxu0 0
    %138 = vmatpush1.bf16.msra.mxu0 0
    %139 = vmatprep.subr.bf16.mxu0 0
    %140 = vmatpush1.bf16.msra.mxu0 0
    %141 = vmatprep.subr.bf16.mxu0 0
    %142 = vmatpush1.bf16.msra.mxu0 0
    %143 = vmatprep.subr.bf16.mxu0 0
    %144 = vmatpush1.bf16.msra.mxu0 0
    %145 = vmatprep.subr.bf16.mxu0 0
    %146 = vmatpush1.bf16.msra.mxu0 0
    %147 = vmatprep.subr.bf16.mxu0 0
    %148 = vmatpush1.bf16.msra.mxu0 0
    %149 = vmatprep.subr.bf16.mxu0 0
    %150 = vmatpush1.bf16.msra.mxu0 0
    %151 = vmatprep.subr.bf16.mxu0 0
    %152 = vmatpush1.bf16.msra.mxu0 0
    %153 = vmatprep.subr.bf16.mxu0 0
    %154 = vmatpush1.bf16.msra.mxu0 0
    %155 = vmatprep.subr.bf16.mxu0 0
    %156 = vmatpush1.bf16.msra.mxu0 0
    %157 = vmatprep.mubr.bf16.mxu0 0
    %158 = vmatmul.mubr.bf16.gmra.mrb[0].mxu0 %v107
    %v159 = vpop.f32.mrb[0].mxu0
    %v160 = vadd.f32 %v58, %v159
    %v161 = vpop.f32.mrb[0].mxu0
    %v162 = vadd.f32 %v62, %v161
    %v163 = vpop.f32.mrb[0].mxu0
    %v164 = vpop.f32.mrb[0].mxu0
    %165 = vdwg.mxu0
    %166 = vmatprep.subr.bf16.mxu0 %v96
    %167 = vmatpush1.bf16.msra.mxu0 %v95
    %168 = vmatprep.subr.bf16.mxu0 %v123
    %169 = vmatpush1.bf16.msra.mxu0 %v120
    %170 = vmatprep.subr.bf16.mxu0 0
    %171 = vmatpush1.bf16.msra.mxu0 0
    %172 = vmatprep.subr.bf16.mxu0 0
    %173 = vmatpush1.bf16.msra.mxu0 0
    %174 = vmatprep.subr.bf16.mxu0 0
    %175 = vmatpush1.bf16.msra.mxu0 0
    %176 = vmatprep.subr.bf16.mxu0 0
    %177 = vmatpush1.bf16.msra.mxu0 0
    %178 = vmatprep.subr.bf16.mxu0 0
    %179 = vmatpush1.bf16.msra.mxu0 0
    %180 = vmatprep.subr.bf16.mxu0 0
    %181 = vmatpush1.bf16.msra.mxu0 0
    %182 = vmatprep.subr.bf16.mxu0 0
    %183 = vmatpush1.bf16.msra.mxu0 0
    %184 = vmatprep.subr.bf16.mxu0 0
    %185 = vmatpush1.bf16.msra.mxu0 0
    %186 = vmatprep.subr.bf16.mxu0 0
    %187 = vmatpush1.bf16.msra.mxu0 0
    %188 = vmatprep.subr.bf16.mxu0 0
    %189 = vmatpush1.bf16.msra.mxu0 0
    %190 = vmatprep.subr.bf16.mxu0 0
    %191 = vmatpush1.bf16.msra.mxu0 0
    %192 = vmatprep.subr.bf16.mxu0 0
    %193 = vmatpush1.bf16.msra.mxu0 0
    %194 = vmatprep.subr.bf16.mxu0 0
    %195 = vmatpush1.bf16.msra.mxu0 0
    %196 = vmatprep.subr.bf16.mxu0 0
    %197 = vmatpush1.bf16.msra.mxu0 0
    %198 = vmatprep.mubr.bf16.mxu0 0
    %199 = vmatmul.mubr.bf16.gmra.mrb[0].mxu0 %v107
    %v200 = vpop.f32.mrb[0].mxu0
    %v201 = vadd.f32 %v66, %v200
    %v202 = vpop.f32.mrb[0].mxu0
    %v203 = vadd.f32 %v70, %v202
    %v204 = vpop.f32.mrb[0].mxu0
    %v205 = vpop.f32.mrb[0].mxu0
    %206 = vdwg.mxu0
    %v207 = vmax.f32 %v160, 0.0
    %v208 = vmax.f32 %v162, 0.0
    %v209 = vmax.f32 %v201, 0.0
    %v210 = vmax.f32 %v203, 0.0
    %v211 = vpack.c.bf16 %v207, %v207
    %v212 = vpack.c.bf16 %v208, %v208
    %v213 = vpack.c.bf16 %v209, %v209
    %v214 = vpack.c.bf16 %v210, %v210
    %v215 = vld [vmem:[#allocation2] sm:$0xff]
    %v216 = vld [vmem:[#allocation2 + $0x8] sm:$0xf]
    %v217 = vld [vmem:[#allocation2 + $0xc] sm:$0xff]
    %v218 = vld [vmem:[#allocation2 + $0x14] sm:$0xf]
    %v219 = vld [vmem:[#allocation2 + $0x18] sm:$0xff]
    %v220 = vld [vmem:[#allocation2 + $0x20] sm:$0xf]
    %v221 = vld [vmem:[#allocation2 + $0x24] sm:$0xff]
    %v222 = vld [vmem:[#allocation2 + $0x2c] sm:$0xf]
    %v223 = vld [vmem:[#allocation2 + $0x30] sm:$0xff]
    %v224 = vld [vmem:[#allocation2 + $0x38] sm:$0xf]
    %v225 = vld [vmem:[#allocation2 + $0x3c] sm:$0xff]
    %v226 = vld [vmem:[#allocation2 + $0x44] sm:$0xf]
    %v227 = vld [vmem:[#allocation2 + $0x48] sm:$0xff]
    %v228 = vld [vmem:[#allocation2 + $0x50] sm:$0xf]
    %v229 = vld [vmem:[#allocation2 + $0x54] sm:$0xff]
    %v230 = vld [vmem:[#allocation2 + $0x5c] sm:$0xf]
    %v231 = vld [vmem:[#allocation2 + $0x60] sm:$0xff]
    %v232 = vld [vmem:[#allocation2 + $0x68] sm:$0xf]
    %v233 = vld [vmem:[#allocation2 + $0x6c] sm:$0xff]
    %v234 = vld [vmem:[#allocation2 + $0x74] sm:$0xf]
    %v235 = vld [vmem:[#allocation2 + $0x78] sm:$0xff]
    %v236 = vld [vmem:[#allocation2 + $0x80] sm:$0xf]
    %v237 = vld [vmem:[#allocation2 + $0x84] sm:$0xff]
    %v238 = vld [vmem:[#allocation2 + $0x8c] sm:$0xf]
    %v239 = vld [vmem:[#allocation2 + $0x90] sm:$0xff]
    %v240 = vld [vmem:[#allocation2 + $0x98] sm:$0xf]
    %v241 = vld [vmem:[#allocation2 + $0x9c] sm:$0xff]
    %v242 = vld [vmem:[#allocation2 + $0xa4] sm:$0xf]
    %v243 = vld [vmem:[#allocation2 + $0xa8] sm:$0xff]
    %v244 = vld [vmem:[#allocation2 + $0xb0] sm:$0xf]
    %v245 = vld [vmem:[#allocation2 + $0xb4] sm:$0xff]
    %v246 = vld [vmem:[#allocation2 + $0xbc] sm:$0xf]
    %v247 = vld [vmem:[#allocation2 + $0xc0] sm:$0xff]
    %v248 = vld [vmem:[#allocation2 + $0xc8] sm:$0xf]
    %v249 = vld [vmem:[#allocation2 + $0xcc] sm:$0xff]
    %v250 = vld [vmem:[#allocation2 + $0xd4] sm:$0xf]
    %v251 = vld [vmem:[#allocation2 + $0xd8] sm:$0xff]
    %v252 = vld [vmem:[#allocation2 + $0xe0] sm:$0xf]
    %v253 = vld [vmem:[#allocation2 + $0xe4] sm:$0xff]
    %v254 = vld [vmem:[#allocation2 + $0xec] sm:$0xf]
    %v255 = vld [vmem:[#allocation2 + $0xf0] sm:$0xff]
    %v256 = vld [vmem:[#allocation2 + $0xf8] sm:$0xf]
    %v257 = vld [vmem:[#allocation2 + $0xfc] sm:$0xff]
    %v258 = vld [vmem:[#allocation2 + $0x104] sm:$0xf]
    %v259 = vld [vmem:[#allocation2 + $0x108] sm:$0xff]
    %v260 = vld [vmem:[#allocation2 + $0x110] sm:$0xf]
    %v261 = vld [vmem:[#allocation2 + $0x114] sm:$0xff]
    %v262 = vld [vmem:[#allocation2 + $0x11c] sm:$0xf]
    %v263 = vld [vmem:[#allocation2 + $0x120] sm:$0xff]
    %v264 = vld [vmem:[#allocation2 + $0x128] sm:$0xf]
    %v265 = vld [vmem:[#allocation2 + $0x12c] sm:$0xff]
    %v266 = vld [vmem:[#allocation2 + $0x134] sm:$0xf]
    %v267 = vld [vmem:[#allocation2 + $0x138] sm:$0xff]
    %v268 = vld [vmem:[#allocation2 + $0x140] sm:$0xf]
    %v269 = vld [vmem:[#allocation2 + $0x144] sm:$0xff]
    %v270 = vld [vmem:[#allocation2 + $0x14c] sm:$0xf]
    %v271 = vld [vmem:[#allocation2 + $0x150] sm:$0xff]
    %v272 = vld [vmem:[#allocation2 + $0x158] sm:$0xf]
    %v273 = vld [vmem:[#allocation2 + $0x15c] sm:$0xff]
    %v274 = vld [vmem:[#allocation2 + $0x164] sm:$0xf]
    %v275 = vld [vmem:[#allocation2 + $0x168] sm:$0xff]
    %v276 = vld [vmem:[#allocation2 + $0x170] sm:$0xf]
    %v277 = vld [vmem:[#allocation2 + $0x174] sm:$0xff]
    %v278 = vld [vmem:[#allocation2 + $0x17c] sm:$0xf]
    %v279 = vld [vmem:[#allocation2 + $0x180] sm:$0xff]
    %v280 = vld [vmem:[#allocation2 + $0x188] sm:$0xf]
    %v281 = vld [vmem:[#allocation2 + $0x18c] sm:$0xff]
    %v282 = vld [vmem:[#allocation2 + $0x194] sm:$0xf]
    %v283 = vld [vmem:[#allocation2 + $0x198] sm:$0xff]
    %v284 = vld [vmem:[#allocation2 + $0x1a0] sm:$0xf]
    %v285 = vld [vmem:[#allocation2 + $0x1a4] sm:$0xff]
    %v286 = vld [vmem:[#allocation2 + $0x1ac] sm:$0xf]
    %v287 = vld [vmem:[#allocation2 + $0x1b0] sm:$0xff]
    %v288 = vld [vmem:[#allocation2 + $0x1b8] sm:$0xf]
    %v289 = vld [vmem:[#allocation2 + $0x1bc] sm:$0xff]
    %v290 = vld [vmem:[#allocation2 + $0x1c4] sm:$0xf]
    %v291 = vld [vmem:[#allocation2 + $0x1c8] sm:$0xff]
    %v292 = vld [vmem:[#allocation2 + $0x1d0] sm:$0xf]
    %v293 = vld [vmem:[#allocation2 + $0x1d4] sm:$0xff]
    %v294 = vld [vmem:[#allocation2 + $0x1dc] sm:$0xf]
    %v295 = vld [vmem:[#allocation2 + $0x1e0] sm:$0xff]
    %v296 = vld [vmem:[#allocation2 + $0x1e8] sm:$0xf]
    %v297 = vld [vmem:[#allocation2 + $0x1ec] sm:$0xff]
    %v298 = vld [vmem:[#allocation2 + $0x1f4] sm:$0xf]
    %v299 = vld [vmem:[#allocation2 + $0x1f8] sm:$0xff]
    %v300 = vld [vmem:[#allocation2 + $0x200] sm:$0xf]
    %v301 = vld [vmem:[#allocation2 + $0x204] sm:$0xff]
    %v302 = vld [vmem:[#allocation2 + $0x20c] sm:$0xf]
    %v303 = vld [vmem:[#allocation2 + $0x210] sm:$0xff]
    %v304 = vld [vmem:[#allocation2 + $0x218] sm:$0xf]
    %v305 = vld [vmem:[#allocation2 + $0x21c] sm:$0xff]
    %v306 = vld [vmem:[#allocation2 + $0x224] sm:$0xf]
    %v307 = vld [vmem:[#allocation2 + $0x228] sm:$0xff]
    %v308 = vld [vmem:[#allocation2 + $0x230] sm:$0xf]
    %v309 = vld [vmem:[#allocation2 + $0x234] sm:$0xff]
    %v310 = vld [vmem:[#allocation2 + $0x23c] sm:$0xf]
    %v311 = vld [vmem:[#allocation2 + $0x240] sm:$0xff]
    %v312 = vld [vmem:[#allocation2 + $0x248] sm:$0xf]
    %v313 = vld [vmem:[#allocation2 + $0x24c] sm:$0xff]
    %v314 = vld [vmem:[#allocation2 + $0x254] sm:$0xf]
    %v315 = vld [vmem:[%s5] sm:$0x7]
    %v317 = vlaneseq
    %v318 = vshrl.u32 %v317, 7
    %v319 = vsub.s32 0, %v318
    %v320 = vrot.slane %v315, %v319
    %v321 = vlaneseq
    %v322 = vshrl.u32 %v321, 7
    %v323 = vsub.s32 1, %v322
    %v324 = vrot.slane %v315, %v323
    %v325 = vlaneseq
    %v326 = vshrl.u32 %v325, 7
    %v327 = vsub.s32 2, %v326
    %v328 = vrot.slane %v315, %v327
    %v432 = vunpack.c.l.b16 %v215
    %v433 = vunpack.c.h.b16 %v215
    %v434 = vunpack.c.l.b16 %v216
    %v435 = vunpack.c.l.b16 %v217
    %v436 = vunpack.c.h.b16 %v217
    %v437 = vunpack.c.l.b16 %v218
    %v438 = vunpack.c.l.b16 %v219
    %v439 = vunpack.c.h.b16 %v219
    %v440 = vunpack.c.l.b16 %v220
    %v441 = vunpack.c.l.b16 %v221
    %v442 = vunpack.c.h.b16 %v221
    %v443 = vunpack.c.l.b16 %v222
    %v444 = vunpack.c.l.b16 %v223
    %v445 = vunpack.c.h.b16 %v223
    %v446 = vunpack.c.l.b16 %v224
    %v447 = vunpack.c.l.b16 %v225
    %v448 = vunpack.c.h.b16 %v225
    %v449 = vunpack.c.l.b16 %v226
    %v450 = vunpack.c.l.b16 %v227
    %v451 = vunpack.c.h.b16 %v227
    %v452 = vunpack.c.l.b16 %v228
    %v453 = vunpack.c.l.b16 %v229
    %v454 = vunpack.c.h.b16 %v229
    %v455 = vunpack.c.l.b16 %v230
    %v456 = vunpack.c.l.b16 %v231
    %v457 = vunpack.c.h.b16 %v231
    %v458 = vunpack.c.l.b16 %v232
    %v459 = vunpack.c.l.b16 %v233
    %v460 = vunpack.c.h.b16 %v233
    %v461 = vunpack.c.l.b16 %v234
    %v462 = vunpack.c.l.b16 %v235
    %v463 = vunpack.c.h.b16 %v235
    %v464 = vunpack.c.l.b16 %v236
    %v465 = vunpack.c.l.b16 %v237
    %v466 = vunpack.c.h.b16 %v237
    %v467 = vunpack.c.l.b16 %v238
    %v468 = vunpack.c.l.b16 %v239
    %v469 = vunpack.c.h.b16 %v239
    %v470 = vunpack.c.l.b16 %v240
    %v471 = vunpack.c.l.b16 %v241
    %v472 = vunpack.c.h.b16 %v241
    %v473 = vunpack.c.l.b16 %v242
    %v474 = vunpack.c.l.b16 %v243
    %v475 = vunpack.c.h.b16 %v243
    %v476 = vunpack.c.l.b16 %v244
    %v477 = vunpack.c.l.b16 %v245
    %v478 = vunpack.c.h.b16 %v245
    %v479 = vunpack.c.l.b16 %v246
    %v480 = vunpack.c.l.b16 %v247
    %v481 = vunpack.c.h.b16 %v247
    %v482 = vunpack.c.l.b16 %v248
    %v483 = vunpack.c.l.b16 %v249
    %v484 = vunpack.c.h.b16 %v249
    %v485 = vunpack.c.l.b16 %v250
    %v486 = vunpack.c.l.b16 %v251
    %v487 = vunpack.c.h.b16 %v251
    %v488 = vunpack.c.l.b16 %v252
    %v489 = vunpack.c.l.b16 %v253
    %v490 = vunpack.c.h.b16 %v253
    %v491 = vunpack.c.l.b16 %v254
    %v492 = vunpack.c.l.b16 %v255
    %v493 = vunpack.c.h.b16 %v255
    %v494 = vunpack.c.l.b16 %v256
    %v495 = vunpack.c.l.b16 %v257
    %v496 = vunpack.c.h.b16 %v257
    %v497 = vunpack.c.l.b16 %v258
    %v498 = vunpack.c.l.b16 %v259
    %v499 = vunpack.c.h.b16 %v259
    %v500 = vunpack.c.l.b16 %v260
    %v501 = vunpack.c.l.b16 %v261
    %v502 = vunpack.c.h.b16 %v261
    %v503 = vunpack.c.l.b16 %v262
    %v504 = vunpack.c.l.b16 %v263
    %v505 = vunpack.c.h.b16 %v263
    %v506 = vunpack.c.l.b16 %v264
    %v507 = vunpack.c.l.b16 %v265
    %v508 = vunpack.c.h.b16 %v265
    %v509 = vunpack.c.l.b16 %v266
    %v510 = vunpack.c.l.b16 %v267
    %v511 = vunpack.c.h.b16 %v267
    %v512 = vunpack.c.l.b16 %v268
    %v513 = vunpack.c.l.b16 %v269
    %v514 = vunpack.c.h.b16 %v269
    %v515 = vunpack.c.l.b16 %v270
    %v516 = vunpack.c.l.b16 %v271
    %v517 = vunpack.c.h.b16 %v271
    %v518 = vunpack.c.l.b16 %v272
    %v519 = vunpack.c.l.b16 %v273
    %v520 = vunpack.c.h.b16 %v273
    %v521 = vunpack.c.l.b16 %v274
    %v522 = vunpack.c.l.b16 %v275
    %v523 = vunpack.c.h.b16 %v275
    %v524 = vunpack.c.l.b16 %v276
    %v525 = vunpack.c.l.b16 %v277
    %v526 = vunpack.c.h.b16 %v277
    %v527 = vunpack.c.l.b16 %v278
    %v528 = vunpack.c.l.b16 %v279
    %v529 = vunpack.c.h.b16 %v279
    %v530 = vunpack.c.l.b16 %v280
    %v531 = vunpack.c.l.b16 %v281
    %v532 = vunpack.c.h.b16 %v281
    %v533 = vunpack.c.l.b16 %v282
    %v534 = vunpack.c.l.b16 %v283
    %v535 = vunpack.c.h.b16 %v283
    %v536 = vunpack.c.l.b16 %v284
    %v537 = vunpack.c.l.b16 %v285
    %v538 = vunpack.c.h.b16 %v285
    %v539 = vunpack.c.l.b16 %v286
    %v540 = vunpack.c.l.b16 %v287
    %v541 = vunpack.c.h.b16 %v287
    %v542 = vunpack.c.l.b16 %v288
    %v543 = vunpack.c.l.b16 %v289
    %v544 = vunpack.c.h.b16 %v289
    %v545 = vunpack.c.l.b16 %v290
    %v546 = vunpack.c.l.b16 %v291
    %v547 = vunpack.c.h.b16 %v291
    %v548 = vunpack.c.l.b16 %v292
    %v549 = vunpack.c.l.b16 %v293
    %v550 = vunpack.c.h.b16 %v293
    %v551 = vunpack.c.l.b16 %v294
    %v552 = vunpack.c.l.b16 %v295
    %v553 = vunpack.c.h.b16 %v295
    %v554 = vunpack.c.l.b16 %v296
    %v555 = vunpack.c.l.b16 %v297
    %v556 = vunpack.c.h.b16 %v297
    %v557 = vunpack.c.l.b16 %v298
    %v558 = vunpack.c.l.b16 %v299
    %v559 = vunpack.c.h.b16 %v299
    %v560 = vunpack.c.l.b16 %v300
    %v561 = vunpack.c.l.b16 %v301
    %v562 = vunpack.c.h.b16 %v301
    %v563 = vunpack.c.l.b16 %v302
    %v564 = vunpack.c.l.b16 %v303
    %v565 = vunpack.c.h.b16 %v303
    %v566 = vunpack.c.l.b16 %v304
    %v567 = vunpack.c.l.b16 %v305
    %v568 = vunpack.c.h.b16 %v305
    %v569 = vunpack.c.l.b16 %v306
    %v570 = vunpack.c.l.b16 %v307
    %v571 = vunpack.c.h.b16 %v307
    %v572 = vunpack.c.l.b16 %v308
    %v573 = vunpack.c.l.b16 %v309
    %v574 = vunpack.c.h.b16 %v309
    %v575 = vunpack.c.l.b16 %v310
    %v576 = vunpack.c.l.b16 %v311
    %v577 = vunpack.c.h.b16 %v311
    %v578 = vunpack.c.l.b16 %v312
    %v579 = vunpack.c.l.b16 %v313
    %v580 = vunpack.c.h.b16 %v313
    %v581 = vunpack.c.l.b16 %v314
    %v582 = vpack.c.b16 %v435, %v432
    %v583 = vpack.c.b16 %v436, %v433
    %v584 = vpack.c.b16 %v437, %v434
    %v585 = vpack.c.b16 %v441, %v438
    %v586 = vpack.c.b16 %v442, %v439
    %v587 = vpack.c.b16 %v443, %v440
    %v588 = vpack.c.b16 %v447, %v444
    %v589 = vpack.c.b16 %v448, %v445
    %v590 = vpack.c.b16 %v449, %v446
    %v591 = vpack.c.b16 %v453, %v450
    %v592 = vpack.c.b16 %v454, %v451
    %v593 = vpack.c.b16 %v455, %v452
    %v594 = vpack.c.b16 %v459, %v456
    %v595 = vpack.c.b16 %v460, %v457
    %v596 = vpack.c.b16 %v461, %v458
    %v597 = vpack.c.b16 %v465, %v462
    %v598 = vpack.c.b16 %v466, %v463
    %v599 = vpack.c.b16 %v467, %v464
    %v600 = vpack.c.b16 %v471, %v468
    %v601 = vpack.c.b16 %v472, %v469
    %v602 = vpack.c.b16 %v473, %v470
    %v603 = vpack.c.b16 %v477, %v474
    %v604 = vpack.c.b16 %v478, %v475
    %v605 = vpack.c.b16 %v479, %v476
    %v606 = vpack.c.b16 %v483, %v480
    %v607 = vpack.c.b16 %v484, %v481
    %v608 = vpack.c.b16 %v485, %v482
    %v609 = vpack.c.b16 %v489, %v486
    %v610 = vpack.c.b16 %v490, %v487
    %v611 = vpack.c.b16 %v491, %v488
    %v612 = vpack.c.b16 %v495, %v492
    %v613 = vpack.c.b16 %v496, %v493
    %v614 = vpack.c.b16 %v497, %v494
    %v615 = vpack.c.b16 %v501, %v498
    %v616 = vpack.c.b16 %v502, %v499
    %v617 = vpack.c.b16 %v503, %v500
    %v618 = vpack.c.b16 %v507, %v504
    %v619 = vpack.c.b16 %v508, %v505
    %v620 = vpack.c.b16 %v509, %v506
    %v621 = vpack.c.b16 %v513, %v510
    %v622 = vpack.c.b16 %v514, %v511
    %v623 = vpack.c.b16 %v515, %v512
    %v624 = vpack.c.b16 %v519, %v516
    %v625 = vpack.c.b16 %v520, %v517
    %v626 = vpack.c.b16 %v521, %v518
    %v627 = vpack.c.b16 %v525, %v522
    %v628 = vpack.c.b16 %v526, %v523
    %v629 = vpack.c.b16 %v527, %v524
    %v630 = vpack.c.b16 %v531, %v528
    %v631 = vpack.c.b16 %v532, %v529
    %v632 = vpack.c.b16 %v533, %v530
    %v633 = vpack.c.b16 %v537, %v534
    %v634 = vpack.c.b16 %v538, %v535
    %v635 = vpack.c.b16 %v539, %v536
    %v636 = vpack.c.b16 %v543, %v540
    %v637 = vpack.c.b16 %v544, %v541
    %v638 = vpack.c.b16 %v545, %v542
    %v639 = vpack.c.b16 %v549, %v546
    %v640 = vpack.c.b16 %v550, %v547
    %v641 = vpack.c.b16 %v551, %v548
    %v642 = vpack.c.b16 %v555, %v552
    %v643 = vpack.c.b16 %v556, %v553
    %v644 = vpack.c.b16 %v557, %v554
    %v645 = vpack.c.b16 %v561, %v558
    %v646 = vpack.c.b16 %v562, %v559
    %v647 = vpack.c.b16 %v563, %v560
    %v648 = vpack.c.b16 %v567, %v564
    %v649 = vpack.c.b16 %v568, %v565
    %v650 = vpack.c.b16 %v569, %v566
    %v651 = vpack.c.b16 %v573, %v570
    %v652 = vpack.c.b16 %v574, %v571
    %v653 = vpack.c.b16 %v575, %v572
    %v654 = vpack.c.b16 %v579, %v576
    %v655 = vpack.c.b16 %v580, %v577
    %v656 = vpack.c.b16 %v581, %v578
    %vm732 = vcmask 130048
    %v734 = vsel %vm732, %v214, 0
    %736 = vmatprep.subr.bf16.mxu0 %v583
    %737 = vmatpush1.bf16.msra.mxu0 %v582
    %738 = vmatprep.subr.bf16.mxu0 %v586
    %739 = vmatpush1.bf16.msra.mxu0 %v585
    %740 = vmatprep.subr.bf16.mxu0 %v589
    %741 = vmatpush1.bf16.msra.mxu0 %v588
    %742 = vmatprep.subr.bf16.mxu0 %v592
    %743 = vmatpush1.bf16.msra.mxu0 %v591
    %744 = vmatprep.subr.bf16.mxu0 %v595
    %745 = vmatpush1.bf16.msra.mxu0 %v594
    %746 = vmatprep.subr.bf16.mxu0 %v598
    %747 = vmatpush1.bf16.msra.mxu0 %v597
    %748 = vmatprep.subr.bf16.mxu0 %v601
    %749 = vmatpush1.bf16.msra.mxu0 %v600
    %750 = vmatprep.subr.bf16.mxu0 %v604
    %751 = vmatpush1.bf16.msra.mxu0 %v603
    %752 = vmatprep.subr.bf16.mxu0 %v607
    %753 = vmatpush1.bf16.msra.mxu0 %v606
    %754 = vmatprep.subr.bf16.mxu0 %v610
    %755 = vmatpush1.bf16.msra.mxu0 %v609
    %756 = vmatprep.subr.bf16.mxu0 %v613
    %757 = vmatpush1.bf16.msra.mxu0 %v612
    %758 = vmatprep.subr.bf16.mxu0 %v616
    %759 = vmatpush1.bf16.msra.mxu0 %v615
    %760 = vmatprep.subr.bf16.mxu0 %v619
    %761 = vmatpush1.bf16.msra.mxu0 %v618
    %762 = vmatprep.subr.bf16.mxu0 %v622
    %763 = vmatpush1.bf16.msra.mxu0 %v621
    %764 = vmatprep.subr.bf16.mxu0 %v625
    %765 = vmatpush1.bf16.msra.mxu0 %v624
    %766 = vmatprep.subr.bf16.mxu0 %v628
    %767 = vmatpush1.bf16.msra.mxu0 %v627
    %768 = vmatprep.mubr.bf16.mxu0 %v212
    %769 = vmatmul.mubr.bf16.gmra.mrb[0].mxu0 %v211
    %v770 = vpop.f32.mrb[0].mxu0
    %v771 = vadd.f32 %v320, %v770
    %v772 = vpop.f32.mrb[0].mxu0
    %v773 = vadd.f32 %v324, %v772
    %v774 = vpop.f32.mrb[0].mxu0
    %v775 = vpop.f32.mrb[0].mxu0
    %776 = vdwg.mxu0
    %777 = vmatprep.subr.bf16.mxu0 %v631
    %778 = vmatpush1.bf16.msra.mxu0 %v630
    %779 = vmatprep.subr.bf16.mxu0 %v634
    %780 = vmatpush1.bf16.msra.mxu0 %v633
    %781 = vmatprep.subr.bf16.mxu0 %v637
    %782 = vmatpush1.bf16.msra.mxu0 %v636
    %783 = vmatprep.subr.bf16.mxu0 %v640
    %784 = vmatpush1.bf16.msra.mxu0 %v639
    %785 = vmatprep.subr.bf16.mxu0 %v643
    %786 = vmatpush1.bf16.msra.mxu0 %v642
    %787 = vmatprep.subr.bf16.mxu0 %v646
    %788 = vmatpush1.bf16.msra.mxu0 %v645
    %789 = vmatprep.subr.bf16.mxu0 %v649
    %790 = vmatpush1.bf16.msra.mxu0 %v648
    %791 = vmatprep.subr.bf16.mxu0 %v652
    %792 = vmatpush1.bf16.msra.mxu0 %v651
    %793 = vmatprep.subr.bf16.mxu0 %v655
    %794 = vmatpush1.bf16.msra.mxu0 %v654
    %795 = vmatprep.subr.bf16.mxu0 0
    %796 = vmatpush1.bf16.msra.mxu0 0
    %797 = vmatprep.subr.bf16.mxu0 0
    %798 = vmatpush1.bf16.msra.mxu0 0
    %799 = vmatprep.subr.bf16.mxu0 0
    %800 = vmatpush1.bf16.msra.mxu0 0
    %801 = vmatprep.subr.bf16.mxu0 0
    %802 = vmatpush1.bf16.msra.mxu0 0
    %803 = vmatprep.subr.bf16.mxu0 0
    %804 = vmatpush1.bf16.msra.mxu0 0
    %805 = vmatprep.subr.bf16.mxu0 0
    %806 = vmatpush1.bf16.msra.mxu0 0
    %807 = vmatprep.subr.bf16.mxu0 0
    %808 = vmatpush1.bf16.msra.mxu0 0
    %809 = vmatprep.mubr.bf16.mxu0 %v734
    %810 = vmatmul.mubr.bf16.gmra.mrb[0].mxu0 %v213
    %v811 = vpop.f32.mrb[0].mxu0
    %v812 = vadd.f32 %v771, %v811
    %v813 = vpop.f32.mrb[0].mxu0
    %v814 = vadd.f32 %v773, %v813
    %v815 = vpop.f32.mrb[0].mxu0
    %v816 = vpop.f32.mrb[0].mxu0
    %817 = vdwg.mxu0
    %818 = vmatprep.subr.bf16.mxu0 0
    %819 = vmatpush1.bf16.msra.mxu0 %v584
    %820 = vmatprep.subr.bf16.mxu0 0
    %821 = vmatpush1.bf16.msra.mxu0 %v587
    %822 = vmatprep.subr.bf16.mxu0 0
    %823 = vmatpush1.bf16.msra.mxu0 %v590
    %824 = vmatprep.subr.bf16.mxu0 0
    %825 = vmatpush1.bf16.msra.mxu0 %v593
    %826 = vmatprep.subr.bf16.mxu0 0
    %827 = vmatpush1.bf16.msra.mxu0 %v596
    %828 = vmatprep.subr.bf16.mxu0 0
    %829 = vmatpush1.bf16.msra.mxu0 %v599
    %830 = vmatprep.subr.bf16.mxu0 0
    %831 = vmatpush1.bf16.msra.mxu0 %v602
    %832 = vmatprep.subr.bf16.mxu0 0
    %833 = vmatpush1.bf16.msra.mxu0 %v605
    %834 = vmatprep.subr.bf16.mxu0 0
    %835 = vmatpush1.bf16.msra.mxu0 %v608
    %836 = vmatprep.subr.bf16.mxu0 0
    %837 = vmatpush1.bf16.msra.mxu0 %v611
    %838 = vmatprep.subr.bf16.mxu0 0
    %839 = vmatpush1.bf16.msra.mxu0 %v614
    %840 = vmatprep.subr.bf16.mxu0 0
    %841 = vmatpush1.bf16.msra.mxu0 %v617
    %842 = vmatprep.subr.bf16.mxu0 0
    %843 = vmatpush1.bf16.msra.mxu0 %v620
    %844 = vmatprep.subr.bf16.mxu0 0
    %845 = vmatpush1.bf16.msra.mxu0 %v623
    %846 = vmatprep.subr.bf16.mxu0 0
    %847 = vmatpush1.bf16.msra.mxu0 %v626
    %848 = vmatprep.subr.bf16.mxu0 0
    %849 = vmatpush1.bf16.msra.mxu0 %v629
    %850 = vmatprep.mubr.bf16.mxu0 %v212
    %851 = vmatmul.mubr.bf16.gmra.mrb[0].mxu0 %v211
    %v852 = vpop.f32.mrb[0].mxu0
    %v853 = vadd.f32 %v328, %v852
    %v854 = vpop.f32.mrb[0].mxu0
    %v855 = vpop.f32.mrb[0].mxu0
    %v856 = vpop.f32.mrb[0].mxu0
    %857 = vdwg.mxu0
    %858 = vmatprep.subr.bf16.mxu0 0
    %859 = vmatpush1.bf16.msra.mxu0 %v632
    %860 = vmatprep.subr.bf16.mxu0 0
    %861 = vmatpush1.bf16.msra.mxu0 %v635
    %862 = vmatprep.subr.bf16.mxu0 0
    %863 = vmatpush1.bf16.msra.mxu0 %v638
    %864 = vmatprep.subr.bf16.mxu0 0
    %865 = vmatpush1.bf16.msra.mxu0 %v641
    %866 = vmatprep.subr.bf16.mxu0 0
    %867 = vmatpush1.bf16.msra.mxu0 %v644
    %868 = vmatprep.subr.bf16.mxu0 0
    %869 = vmatpush1.bf16.msra.mxu0 %v647
    %870 = vmatprep.subr.bf16.mxu0 0
    %871 = vmatpush1.bf16.msra.mxu0 %v650
    %872 = vmatprep.subr.bf16.mxu0 0
    %873 = vmatpush1.bf16.msra.mxu0 %v653
    %874 = vmatprep.subr.bf16.mxu0 0
    %875 = vmatpush1.bf16.msra.mxu0 %v656
    %876 = vmatprep.subr.bf16.mxu0 0
    %877 = vmatpush1.bf16.msra.mxu0 0
    %878 = vmatprep.subr.bf16.mxu0 0
    %879 = vmatpush1.bf16.msra.mxu0 0
    %880 = vmatprep.subr.bf16.mxu0 0
    %881 = vmatpush1.bf16.msra.mxu0 0
    %882 = vmatprep.subr.bf16.mxu0 0
    %883 = vmatpush1.bf16.msra.mxu0 0
    %884 = vmatprep.subr.bf16.mxu0 0
    %885 = vmatpush1.bf16.msra.mxu0 0
    %886 = vmatprep.subr.bf16.mxu0 0
    %887 = vmatpush1.bf16.msra.mxu0 0
    %888 = vmatprep.subr.bf16.mxu0 0
    %889 = vmatpush1.bf16.msra.mxu0 0
    %890 = vmatprep.mubr.bf16.mxu0 %v734
    %891 = vmatmul.mubr.bf16.gmra.mrb[0].mxu0 %v213
    %v892 = vpop.f32.mrb[0].mxu0
    %v893 = vadd.f32 %v853, %v892
    %v894 = vpop.f32.mrb[0].mxu0
    %v895 = vpop.f32.mrb[0].mxu0
    %v896 = vpop.f32.mrb[0].mxu0
    %897 = vdwg.mxu0
    %v898 = vmax.f32 %v812, 0.0
    %v899 = vmax.f32 %v814, 0.0
    %v900 = vmax.f32 %v893, 0.0
    %v901 = vpack.c.bf16 %v898, %v898
    %v902 = vpack.c.bf16 %v899, %v899
    %v903 = vpack.c.bf16 %v900, %v900
    %v904 = vld [vmem:[%s6] sm:$0xf]
    %v905 = vld [vmem:[%s6 + $0x4] sm:$0xf]
    %v906 = vld [vmem:[%s6 + $0x8] sm:$0xf]
    %v907 = vld [vmem:[%s6 + $0xc] sm:$0xf]
    %v908 = vld [vmem:[%s6 + $0x10] sm:$0xf]
    %v909 = vld [vmem:[%s6 + $0x14] sm:$0xf]
    %v910 = vld [vmem:[%s6 + $0x18] sm:$0xf]
    %v911 = vld [vmem:[%s6 + $0x1c] sm:$0xf]
    %v912 = vld [vmem:[%s6 + $0x20] sm:$0xf]
    %v913 = vld [vmem:[%s6 + $0x24] sm:$0xf]
    %v914 = vld [vmem:[%s6 + $0x28] sm:$0xf]
    %v915 = vld [vmem:[%s6 + $0x2c] sm:$0xf]
    %v916 = vld [vmem:[%s6 + $0x30] sm:$0xf]
    %v917 = vld [vmem:[%s6 + $0x34] sm:$0xf]
    %v918 = vld [vmem:[%s6 + $0x38] sm:$0xf]
    %v919 = vld [vmem:[%s6 + $0x3c] sm:$0xf]
    %v920 = vld [vmem:[%s6 + $0x40] sm:$0xf]
    %v921 = vld [vmem:[%s6 + $0x44] sm:$0xf]
    %v922 = vld [vmem:[%s6 + $0x48] sm:$0xf]
    %v923 = vld [vmem:[%s6 + $0x4c] sm:$0xf]
    %v924 = vld [vmem:[%s6 + $0x50] sm:$0xf]
    %v925 = vld [vmem:[%s6 + $0x54] sm:$0xf]
    %v926 = vld [vmem:[%s6 + $0x58] sm:$0xf]
    %v927 = vld [vmem:[%s6 + $0x5c] sm:$0xf]
    %v928 = vld [vmem:[%s6 + $0x60] sm:$0xf]
    %v929 = vld [vmem:[%s6 + $0x64] sm:$0xf]
    %v930 = vld [vmem:[%s6 + $0x68] sm:$0xf]
    %v931 = vld [vmem:[%s6 + $0x6c] sm:$0xf]
    %v932 = vld [vmem:[%s6 + $0x70] sm:$0xf]
    %v933 = vld [vmem:[%s6 + $0x74] sm:$0xf]
    %v934 = vld [vmem:[%s6 + $0x78] sm:$0xf]
    %v935 = vld [vmem:[%s6 + $0x7c] sm:$0xf]
    %v936 = vld [vmem:[%s6 + $0x80] sm:$0xf]
    %v937 = vld [vmem:[%s6 + $0x84] sm:$0xf]
    %v938 = vld [vmem:[%s6 + $0x88] sm:$0xf]
    %v939 = vld [vmem:[%s6 + $0x8c] sm:$0xf]
    %v940 = vld [vmem:[%s6 + $0x90] sm:$0xf]
    %v941 = vld [vmem:[%s6 + $0x94] sm:$0x3]
    %v942 = vld [vmem:[%s7] sm:$0x1]
    %v944 = vlaneseq
    %v945 = vshrl.u32 %v944, 7
    %v946 = vsub.s32 0, %v945
    %v947 = vrot.slane %v942, %v946
    %v987 = vunpack.c.l.b16 %v904
    %v988 = vunpack.c.l.b16 %v905
    %v989 = vunpack.c.l.b16 %v906
    %v990 = vunpack.c.l.b16 %v907
    %v991 = vunpack.c.l.b16 %v908
    %v992 = vunpack.c.l.b16 %v909
    %v993 = vunpack.c.l.b16 %v910
    %v994 = vunpack.c.l.b16 %v911
    %v995 = vunpack.c.l.b16 %v912
    %v996 = vunpack.c.l.b16 %v913
    %v997 = vunpack.c.l.b16 %v914
    %v998 = vunpack.c.l.b16 %v915
    %v999 = vunpack.c.l.b16 %v916
    %v1000 = vunpack.c.l.b16 %v917
    %v1001 = vunpack.c.l.b16 %v918
    %v1002 = vunpack.c.l.b16 %v919
    %v1003 = vunpack.c.l.b16 %v920
    %v1004 = vunpack.c.l.b16 %v921
    %v1005 = vunpack.c.l.b16 %v922
    %v1006 = vunpack.c.l.b16 %v923
    %v1007 = vunpack.c.l.b16 %v924
    %v1008 = vunpack.c.l.b16 %v925
    %v1009 = vunpack.c.l.b16 %v926
    %v1010 = vunpack.c.l.b16 %v927
    %v1011 = vunpack.c.l.b16 %v928
    %v1012 = vunpack.c.l.b16 %v929
    %v1013 = vunpack.c.l.b16 %v930
    %v1014 = vunpack.c.l.b16 %v931
    %v1015 = vunpack.c.l.b16 %v932
    %v1016 = vunpack.c.l.b16 %v933
    %v1017 = vunpack.c.l.b16 %v934
    %v1018 = vunpack.c.l.b16 %v935
    %v1019 = vunpack.c.l.b16 %v936
    %v1020 = vunpack.c.l.b16 %v937
    %v1021 = vunpack.c.l.b16 %v938
    %v1022 = vunpack.c.l.b16 %v939
    %v1023 = vunpack.c.l.b16 %v940
    %v1024 = vunpack.c.l.b16 %v941
    %v1025 = vpack.c.b16 %v988, %v987
    %v1026 = vpack.c.b16 %v990, %v989
    %v1027 = vpack.c.b16 %v992, %v991
    %v1028 = vpack.c.b16 %v994, %v993
    %v1029 = vpack.c.b16 %v996, %v995
    %v1030 = vpack.c.b16 %v998, %v997
    %v1031 = vpack.c.b16 %v1000, %v999
    %v1032 = vpack.c.b16 %v1002, %v1001
    %v1033 = vpack.c.b16 %v1004, %v1003
    %v1034 = vpack.c.b16 %v1006, %v1005
    %v1035 = vpack.c.b16 %v1008, %v1007
    %v1036 = vpack.c.b16 %v1010, %v1009
    %v1037 = vpack.c.b16 %v1012, %v1011
    %v1038 = vpack.c.b16 %v1014, %v1013
    %v1039 = vpack.c.b16 %v1016, %v1015
    %v1040 = vpack.c.b16 %v1018, %v1017
    %v1041 = vpack.c.b16 %v1020, %v1019
    %v1042 = vpack.c.b16 %v1022, %v1021
    %v1043 = vpack.c.b16 %v1024, %v1023
    %vm1062 = vcmask 359424
    %v1064 = vsel %vm1062, %v903, 0
    %vm1066 = vcmask 1045504
    %v1068 = vsel %vm1066, %v1043, 0
    %1070 = vmatprep.subr.bf16.mxu0 0
    %1071 = vmatpush1.bf16.msra.mxu0 %v1025
    %1072 = vmatprep.subr.bf16.mxu0 0
    %1073 = vmatpush1.bf16.msra.mxu0 %v1026
    %1074 = vmatprep.subr.bf16.mxu0 0
    %1075 = vmatpush1.bf16.msra.mxu0 %v1027
    %1076 = vmatprep.subr.bf16.mxu0 0
    %1077 = vmatpush1.bf16.msra.mxu0 %v1028
    %1078 = vmatprep.subr.bf16.mxu0 0
    %1079 = vmatpush1.bf16.msra.mxu0 %v1029
    %1080 = vmatprep.subr.bf16.mxu0 0
    %1081 = vmatpush1.bf16.msra.mxu0 %v1030
    %1082 = vmatprep.subr.bf16.mxu0 0
    %1083 = vmatpush1.bf16.msra.mxu0 %v1031
    %1084 = vmatprep.subr.bf16.mxu0 0
    %1085 = vmatpush1.bf16.msra.mxu0 %v1032
    %1086 = vmatprep.subr.bf16.mxu0 0
    %1087 = vmatpush1.bf16.msra.mxu0 %v1033
    %1088 = vmatprep.subr.bf16.mxu0 0
    %1089 = vmatpush1.bf16.msra.mxu0 %v1034
    %1090 = vmatprep.subr.bf16.mxu0 0
    %1091 = vmatpush1.bf16.msra.mxu0 %v1035
    %1092 = vmatprep.subr.bf16.mxu0 0
    %1093 = vmatpush1.bf16.msra.mxu0 %v1036
    %1094 = vmatprep.subr.bf16.mxu0 0
    %1095 = vmatpush1.bf16.msra.mxu0 %v1037
    %1096 = vmatprep.subr.bf16.mxu0 0
    %1097 = vmatpush1.bf16.msra.mxu0 %v1038
    %1098 = vmatprep.subr.bf16.mxu0 0
    %1099 = vmatpush1.bf16.msra.mxu0 %v1039
    %1100 = vmatprep.subr.bf16.mxu0 0
    %1101 = vmatpush1.bf16.msra.mxu0 %v1040
    %1102 = vmatprep.mubr.bf16.mxu0 %v902
    %1103 = vmatmul.mubr.bf16.gmra.mrb[0].mxu0 %v901
    %v1104 = vpop.f32.mrb[0].mxu0
    %v1105 = vadd.f32 %v947, %v1104
    %v1106 = vpop.f32.mrb[0].mxu0
    %v1107 = vpop.f32.mrb[0].mxu0
    %v1108 = vpop.f32.mrb[0].mxu0
    %1109 = vdwg.mxu0
    %1110 = vmatprep.subr.bf16.mxu0 0
    %1111 = vmatpush1.bf16.msra.mxu0 %v1041
    %1112 = vmatprep.subr.bf16.mxu0 0
    %1113 = vmatpush1.bf16.msra.mxu0 %v1042
    %1114 = vmatprep.subr.bf16.mxu0 0
    %1115 = vmatpush1.bf16.msra.mxu0 %v1068
    %1116 = vmatprep.subr.bf16.mxu0 0
    %1117 = vmatpush1.bf16.msra.mxu0 0
    %1118 = vmatprep.subr.bf16.mxu0 0
    %1119 = vmatpush1.bf16.msra.mxu0 0
    %1120 = vmatprep.subr.bf16.mxu0 0
    %1121 = vmatpush1.bf16.msra.mxu0 0
    %1122 = vmatprep.subr.bf16.mxu0 0
    %1123 = vmatpush1.bf16.msra.mxu0 0
    %1124 = vmatprep.subr.bf16.mxu0 0
    %1125 = vmatpush1.bf16.msra.mxu0 0
    %1126 = vmatprep.subr.bf16.mxu0 0
    %1127 = vmatpush1.bf16.msra.mxu0 0
    %1128 = vmatprep.subr.bf16.mxu0 0
    %1129 = vmatpush1.bf16.msra.mxu0 0
    %1130 = vmatprep.subr.bf16.mxu0 0
    %1131 = vmatpush1.bf16.msra.mxu0 0
    %1132 = vmatprep.subr.bf16.mxu0 0
    %1133 = vmatpush1.bf16.msra.mxu0 0
    %1134 = vmatprep.subr.bf16.mxu0 0
    %1135 = vmatpush1.bf16.msra.mxu0 0
    %1136 = vmatprep.subr.bf16.mxu0 0
    %1137 = vmatpush1.bf16.msra.mxu0 0
    %1138 = vmatprep.subr.bf16.mxu0 0
    %1139 = vmatpush1.bf16.msra.mxu0 0
    %1140 = vmatprep.subr.bf16.mxu0 0
    %1141 = vmatpush1.bf16.msra.mxu0 0
    %1142 = vmatprep.mubr.bf16.mxu0 0
    %1143 = vmatmul.mubr.bf16.gmra.mrb[0].mxu0 %v1064
    %v1144 = vpop.f32.mrb[0].mxu0
    %v1145 = vadd.f32 %v1105, %v1144
    %v1146 = vpop.f32.mrb[0].mxu0
    %v1147 = vpop.f32.mrb[0].mxu0
    %v1148 = vpop.f32.mrb[0].mxu0
    %1149 = vdwg.mxu0
    %v1150 = vtanh.pop %v1145
    %v1151 = vmul.f32 %v1150, 0.05
    %v1152 = vld [vmem:[%s1] sm:$0xff]
    %v1153 = vadd.f32 %v1151, %v1152
    %v1154 = vmax.f32 %v1153, -1.0
    %v1155 = vmin.f32 %v1154, 1.0
    %vm1156 = vcmask 48128
    %1157 = vst.msk [vmem:[#allocation5] sm:$0xff] %vm1156, %v1155
    // Predicated region
    $region38: #{tpu_custom_call.1} parent=1 // pred_check
      _
    $region39: #{tpu_custom_call.1} parent=1 // pred_check_branch
      %1159 = sbr.rel (0) target = $region41
    $region40: #{tpu_custom_call.1} parent=1 // pred_region
      %s1161 = ssub.s32 128, 128
      %1162 = vsyncadd [#allocation4], %s1161
      %s1164 = sshll.u32 [#allocation5], 4
      %s1165 = int_to_ptr.vmem [resolvable:$true] %s1164
      %1167 = dma.vmem_to_hbm [thread:$0]  %s1165, 128, %s8, [#allocation4]
    $region41: #{tpu_custom_call.1} parent=1 // pred_fallthru
      _
    // Predicated region
    $region42: #{tpu_custom_call.1} parent=1 // pred_check
      _
    $region43: #{tpu_custom_call.1} parent=1 // pred_check_branch
      %1169 = sbr.rel (0) target = $region45
    $region44: #{tpu_custom_call.1} parent=1 // pred_region
      %1170 = dma.done [#allocation4], 128
    $region45: #{tpu_custom_call.1} parent=1 // pred_fallthru
      _
    %1171 = vsyncpa [#allocation3], 1
    %1172 = vsyncpa [#allocation4], 1

</llo_original>
